<compile_context>
chip_gen: v5e
topology: v5e:2x2
jax: 0.10.0
libtpu: 0.0.40
codegen_flags: <defaults>
</compile_context>

<pallas_src>
import functools

import jax
import jax.numpy as jnp
from jax import lax
from jax.experimental import pallas as pl
from jax.experimental.pallas import tpu as pltpu

_MAX_TILE_ROWS = 512     # 512 rows * 128 lanes * 7 attrs * 4 B ~= 1.75 MiB / input / buffer
_LANES = 128


def _round_up(v, m):
    return -(-v // m) * m


def _rdiou_tile(p_ref, t_ref):
    """Per-box RDIoU loss for one (7, TILE_R, 128) tile pair -> (TILE_R, 128) f32."""
    # ---- decode prediction (extents clamped at 10, as in the reference path) ----
    x1 = p_ref[0]
    y1 = p_ref[1] * 2.0          # empirical y/z scaling from the paper
    z1 = p_ref[2] * 2.0
    l1 = jnp.minimum(jnp.exp(p_ref[3]), 10.0)
    w1 = jnp.minimum(jnp.exp(p_ref[4]), 10.0)
    h1 = jnp.minimum(jnp.exp(p_ref[5]), 10.0)
    a1 = p_ref[6]

    # ---- decode target (unclamped exp: faithful to the torch reference) ----
    x2 = t_ref[0]
    y2 = t_ref[1] * 2.0
    z2 = t_ref[2] * 2.0
    l2 = jnp.exp(t_ref[3])
    w2 = jnp.exp(t_ref[4])
    h2 = jnp.exp(t_ref[5])
    a2 = t_ref[6]

    # rotation-decoupled angle coordinate: t1 = sin(a1)cos(a2), t2 = cos(a1)sin(a2)
    # only ever appear via (t2 - t1) and |t1 - t2|, and t2 - t1 == sin(a2 - a1).
    s = jnp.sin(a2 - a1)
    abs_s = jnp.abs(s)

    volume_1 = l1 * w1 * h1
    volume_2 = l2 * w2 * h2

    # hoisted half-extents / corners, reused by the iw_* and cw_* blocks
    hl1, hw1, hh1 = l1 * 0.5, w1 * 0.5, h1 * 0.5
    hl2, hw2, hh2 = l2 * 0.5, w2 * 0.5, h2 * 0.5
    x1_lo, x1_hi = x1 - hl1, x1 + hl1
    y1_lo, y1_hi = y1 - hw1, y1 + hw1
    z1_lo, z1_hi = z1 - hh1, z1 + hh1
    x2_lo, x2_hi = x2 - hl2, x2 + hl2
    y2_lo, y2_hi = y2 - hw2, y2 + hw2
    z2_lo, z2_hi = z2 - hh2, z2 + hh2

    relu = lambda v: jnp.maximum(v, 0.0)

    # intersection widths in the (x, y, z, angle) space; angle "extent" is 1
    iw_x = relu(jnp.minimum(x1_hi, x2_hi) - jnp.maximum(x1_lo, x2_lo))
    iw_y = relu(jnp.minimum(y1_hi, y2_hi) - jnp.maximum(y1_lo, y2_lo))
    iw_z = relu(jnp.minimum(z1_hi, z2_hi) - jnp.maximum(z1_lo, z2_lo))
    inter_volume = iw_x * iw_y * iw_z * (1.0 - abs_s)

    # smallest enclosing box widths
    cw_x = relu(jnp.maximum(x1_hi, x2_hi) - jnp.minimum(x1_lo, x2_lo))
    cw_y = relu(jnp.maximum(y1_hi, y2_hi) - jnp.minimum(y1_lo, y2_lo))
    cw_z = relu(jnp.maximum(z1_hi, z2_hi) - jnp.minimum(z1_lo, z2_lo))
    cw_a = 1.0 + abs_s

    inter_diag = (x2 - x1) ** 2 + (y2 - y1) ** 2 + (z2 - z1) ** 2 + s * s
    c_diag = cw_x ** 2 + cw_y ** 2 + cw_z ** 2 + cw_a ** 2 + 1e-7

    union = volume_1 + volume_2 - inter_volume
    # rdiou - u == (inter*c_diag - inter_diag*union) / (union*c_diag): one divide
    num = inter_volume * c_diag - inter_diag * union
    den = union * c_diag
    return 1.0 - jnp.clip(num / den, -1.0, 1.0)


def _rdiou_elementwise_kernel(p_ref, t_ref, o_ref):
    """p_ref/t_ref: (7, TILE_R, 128) f32; o_ref: (TILE_R, 128) f32 per-box loss."""
    o_ref[...] = _rdiou_tile(p_ref, t_ref)


def _rdiou_partial_sum_kernel(n_valid, p_ref, t_ref, o_ref):
    """Fused-reduction variant: o_ref (8, 128) holds this grid step's partial sum."""
    tile_r = p_ref.shape[1]
    loss = _rdiou_tile(p_ref, t_ref)
    # Explicitly mask padded boxes (do not rely on zero padding producing zero loss).
    row = lax.broadcasted_iota(jnp.int32, (tile_r, _LANES), 0)
    lane = lax.broadcasted_iota(jnp.int32, (tile_r, _LANES), 1)
    gidx = (pl.program_id(0) * tile_r + row) * _LANES + lane
    loss = jnp.where(gidx < n_valid, loss, 0.0)
    # Fold sublane groups of 8 into an (8, 128) partial: pure VPU adds on
    # (8,128)-aligned static slices (no XLU, no reshape needed).
    acc = loss[0:8, :]
    for g in range(1, tile_r // 8):
        acc = acc + loss[g * 8:(g + 1) * 8, :]
    o_ref[...] = acc


def _pack(pred, target):
    """(N,7) f32 boxes -> (7, rows_pad, 128) dense layout + tiling parameters."""
    n = pred.shape[0]
    rows = max(1, -(-n // _LANES))          # ceil(n / 128) rows of 128 boxes
    rows = _round_up(rows, 8)               # sublane dim never below / not multiple of 8
    # >= 4 grid steps once big enough: megacore sharding on v7x + DMA/compute overlap.
    tile_r = min(_MAX_TILE_ROWS, _round_up(-(-rows // 4), 8))
    rows_pad = _round_up(rows, tile_r)
    n_pad = rows_pad * _LANES

    def pack_one(x):
        x = x.astype(jnp.float32)
        x = jnp.pad(x, ((0, n_pad - n), (0, 0)))       # (n_pad, 7), zero padded
        # TODO(synk): this minor-dim-7 transpose materializes in XLA and roughly
        # doubles HBM traffic of a memory-bound op; the real fix is to produce
        # boxes attribute-major (7, N) upstream / fuse the pack into the producer.
        return x.T.reshape(7, rows_pad, _LANES)

    return pack_one(pred), pack_one(target), rows_pad, tile_r, n, n_pad


@jax.jit
def rd_iou_loss_elementwise(pred, target):
    """Per-box RDIoU loss. pred/target: (N, 7) -> (N,) float32."""
    assert pred.shape == target.shape and pred.shape[-1] == 7
    p, t, rows_pad, tile_r, n, n_pad = _pack(pred, target)
    grid = rows_pad // tile_r
    cost = pl.CostEstimate(flops=80 * n_pad,
                           transcendentals=7 * n_pad,
                           bytes_accessed=(2 * 7 + 1) * 4 * n_pad)
    out = pl.pallas_call(
        _rdiou_elementwise_kernel,
        out_shape=jax.ShapeDtypeStruct((rows_pad, _LANES), jnp.float32),
        grid_spec=pltpu.PrefetchScalarGridSpec(
            num_scalar_prefetch=0,
            grid=(grid,),
            in_specs=[pl.BlockSpec((7, tile_r, _LANES), lambda i: (0, i, 0)),
                      pl.BlockSpec((7, tile_r, _LANES), lambda i: (0, i, 0))],
            out_specs=pl.BlockSpec((tile_r, _LANES), lambda i: (i, 0)),
        ),
        compiler_params=pltpu.CompilerParams(
            dimension_semantics=("parallel",)),
        cost_estimate=cost,
    )(p, t)
    # Padded boxes are sliced off here (they never enter any reduction).
    return out.reshape(n_pad)[:n]


@jax.jit
def rd_iou_loss_sum(pred, target):
    """Sum of per-box RDIoU losses (fused in-kernel reduction). -> scalar f32."""
    assert pred.shape == target.shape and pred.shape[-1] == 7
    p, t, rows_pad, tile_r, n, n_pad = _pack(pred, target)
    grid = rows_pad // tile_r
    cost = pl.CostEstimate(flops=85 * n_pad,
                           transcendentals=7 * n_pad,
                           bytes_accessed=2 * 7 * 4 * n_pad + grid * 8 * _LANES * 4)
    partials = pl.pallas_call(
        functools.partial(_rdiou_partial_sum_kernel, n),
        out_shape=jax.ShapeDtypeStruct((grid * 8, _LANES), jnp.float32),
        grid_spec=pltpu.PrefetchScalarGridSpec(
            num_scalar_prefetch=0,
            grid=(grid,),
            in_specs=[pl.BlockSpec((7, tile_r, _LANES), lambda i: (0, i, 0)),
                      pl.BlockSpec((7, tile_r, _LANES), lambda i: (0, i, 0))],
            out_specs=pl.BlockSpec((8, _LANES), lambda i: (i, 0)),
        ),
        compiler_params=pltpu.CompilerParams(
            dimension_semantics=("parallel",)),
        cost_estimate=cost,
    )(p, t)
    return partials.sum()


class RDIoULoss:
    """JAX/Pallas port of projects/.../losses/rdiouloss.py::RDIoULoss."""

    def __init__(self, reduction="mean", loss_weight=1.0):
        self.reduction = reduction
        self.loss_weight = loss_weight

    def __call__(self, pred, target, weight=None, avg_factor=None,
                 reduction_override=None):
        if weight is not None:
            # Eager-only fast path (torch returns a scalar here regardless of the
            # reduction); skipped silently when running under jit/grad tracing.
            try:
                if not bool(jnp.any(weight > 0)):
                    return pred.sum() * weight.sum()
            except jax.errors.ConcretizationTypeError:
                pass
        assert reduction_override in (None, "none", "mean", "sum")
        reduction = reduction_override if reduction_override else self.reduction
        if weight is not None and weight.ndim > 1:
            weight = weight.mean(-1)

        lead_shape = pred.shape[:-1]
        pred2 = pred.reshape(-1, 7)
        target2 = target.reshape(-1, 7)
        n = pred2.shape[0]

        # Fast path: unweighted mean/sum uses the fused-reduction kernel, so the
        # (N,) loss never round-trips through HBM and no extra dispatch is paid.
        if weight is None and reduction in ("mean", "sum"):
            total = rd_iou_loss_sum(pred2, target2)
            if reduction == "sum":
                if avg_factor is not None:
                    raise ValueError('avg_factor can not be used with reduction="sum"')
                loss = total
            else:
                loss = total / (avg_factor if avg_factor is not None else n)
            return self.loss_weight * loss

        # General path (reduction='none' or per-box weights): elementwise kernel.
        loss_n = rd_iou_loss_elementwise(pred2, target2)
        if weight is not None:
            loss_n = loss_n * weight.reshape(-1)
        if reduction == "none":
            loss = loss_n.reshape(lead_shape)
        elif avg_factor is None:
            loss = loss_n.mean() if reduction == "mean" else loss_n.sum()
        elif reduction == "mean":
            loss = loss_n.sum() / avg_factor
        else:
            raise ValueError('avg_factor can not be used with reduction="sum"')
        return self.loss_weight * loss


# ---- pure-JAX reference (mirrors the torch get_rdiou / rd_iou_loss) ----
def _rd_iou_loss_ref(pred, target):
    p, t = pred.astype(jnp.float32), target.astype(jnp.float32)
    x1, y1, z1 = p[:, 0], p[:, 1] * 2, p[:, 2] * 2
    l1 = jnp.minimum(jnp.exp(p[:, 3]), 10.0)
    w1 = jnp.minimum(jnp.exp(p[:, 4]), 10.0)
    h1 = jnp.minimum(jnp.exp(p[:, 5]), 10.0)
    x2, y2, z2 = t[:, 0], t[:, 1] * 2, t[:, 2] * 2
    l2, w2, h2 = jnp.exp(t[:, 3]), jnp.exp(t[:, 4]), jnp.exp(t[:, 5])
    t1 = jnp.sin(p[:, 6]) * jnp.cos(t[:, 6])
    t2 = jnp.cos(p[:, 6]) * jnp.sin(t[:, 6])
    j1 = j2 = jnp.ones_like(h2)
    v1, v2 = l1 * w1 * h1, l2 * w2 * h2
    r = lambda v: jnp.maximum(v, 0.0)
    iv = (r(jnp.minimum(x1 + l1 / 2, x2 + l2 / 2) - jnp.maximum(x1 - l1 / 2, x2 - l2 / 2))
          * r(jnp.minimum(y1 + w1 / 2, y2 + w2 / 2) - jnp.maximum(y1 - w1 / 2, y2 - w2 / 2))
          * r(jnp.minimum(z1 + h1 / 2, z2 + h2 / 2) - jnp.maximum(z1 - h1 / 2, z2 - h2 / 2))
          * r(jnp.minimum(t1 + j1 / 2, t2 + j2 / 2) - jnp.maximum(t1 - j1 / 2, t2 - j2 / 2)))
    cdiag = (r(jnp.maximum(x1 + l1 / 2, x2 + l2 / 2) - jnp.minimum(x1 - l1 / 2, x2 - l2 / 2)) ** 2
             + r(jnp.maximum(y1 + w1 / 2, y2 + w2 / 2) - jnp.minimum(y1 - w1 / 2, y2 - w2 / 2)) ** 2
             + r(jnp.maximum(z1 + h1 / 2, z2 + h2 / 2) - jnp.minimum(z1 - h1 / 2, z2 - h2 / 2)) ** 2
             + r(jnp.maximum(t1 + j1 / 2, t2 + j2 / 2) - jnp.minimum(t1 - j1 / 2, t2 - j2 / 2)) ** 2
             + 1e-7)
    idiag = (x2 - x1) ** 2 + (y2 - y1) ** 2 + (z2 - z1) ** 2 + (t2 - t1) ** 2
    u = idiag / cdiag
    rdiou = iv / (v1 + v2 - iv)
    return 1.0 - jnp.clip(rdiou - u, -1.0, 1.0)


if __name__ == "__main__":
    key = jax.random.PRNGKey(0)
    loss_fn = RDIoULoss(reduction="mean", loss_weight=1.0)

    for N in (50, 1000):   # small single-tile case + fuller packed case
        k1, k2, k3 = jax.random.split(jax.random.fold_in(key, N), 3)
        pred = jax.random.normal(k1, (N, 7), dtype=jnp.float32) * 0.5
        target = jax.random.normal(k2, (N, 7), dtype=jnp.float32) * 0.5
        weight = jnp.abs(jax.random.normal(k3, (N,), dtype=jnp.float32))

        ref = _rd_iou_loss_ref(pred, target)

        per_box = jax.block_until_ready(rd_iou_loss_elementwise(pred, target))
        assert per_box.shape == (N,)
        assert jnp.allclose(per_box, ref, rtol=1e-5, atol=2e-5), f"elementwise mismatch N={N}"

        total = jax.block_until_ready(rd_iou_loss_sum(pred, target))
        assert jnp.allclose(total, ref.sum(), rtol=1e-4, atol=1e-4), f"fused-sum mismatch N={N}"

        loss_mean = jax.block_until_ready(loss_fn(pred, target))
        assert jnp.allclose(loss_mean, ref.mean(), rtol=1e-4, atol=1e-5), f"mean mismatch N={N}"

        loss_sum = jax.block_until_ready(loss_fn(pred, target, reduction_override="sum"))
        loss_w = jax.block_until_ready(loss_fn(pred, target, weight=weight,
                                               avg_factor=float(N)))
        loss_none = jax.block_until_ready(loss_fn(pred, target,
                                                  reduction_override="none"))
        assert loss_mean.shape == () and loss_w.shape == () and loss_none.shape == (N,)
        assert jnp.isfinite(loss_mean) and jnp.isfinite(loss_w) and jnp.isfinite(loss_sum)

    print("KERNEL_OK")
</pallas_src>

<mosaic_0001>
module attributes {stable_mosaic.version = 11 : i64} {
  func.func @_rdiou_elementwise_kernel(%arg0: i32, %arg1: memref<7x8x128xf32, #tpu.memory_space<vmem>>, %arg2: memref<7x8x128xf32, #tpu.memory_space<vmem>>, %arg3: memref<8x128xf32, #tpu.memory_space<vmem>>) attributes {dimension_semantics = [#tpu.dimension_semantics<parallel>], iteration_bounds = array<i64: 1>, scalar_prefetch = 0 : i64, scratch_operands = 0 : i64, tpu.core_type = #tpu.core_type<tc>, window_params = [{transform_indices = @transform_0, window_bounds = array<i64: 7, 8, 128>}, {transform_indices = @transform_1, window_bounds = array<i64: 7, 8, 128>}, {transform_indices = @transform_2, window_bounds = array<i64: 8, 128>}]} {
    %c0 = arith.constant 0 : index
    %c0_0 = arith.constant 0 : index
    %c0_1 = arith.constant 0 : index
    %0 = vector.load %arg1[%c0, %c0_0, %c0_1] : memref<7x8x128xf32, #tpu.memory_space<vmem>>, vector<1x8x128xf32>
    %1 = vector.shape_cast %0 : vector<1x8x128xf32> to vector<8x128xf32>
    %c1 = arith.constant 1 : index
    %c0_2 = arith.constant 0 : index
    %c0_3 = arith.constant 0 : index
    %2 = vector.load %arg1[%c1, %c0_2, %c0_3] : memref<7x8x128xf32, #tpu.memory_space<vmem>>, vector<1x8x128xf32>
    %3 = vector.shape_cast %2 : vector<1x8x128xf32> to vector<8x128xf32>
    %cst = arith.constant 2.000000e+00 : f32
    %4 = vector.broadcast %cst : f32 to vector<8x128xf32>
    %5 = arith.mulf %3, %4 : vector<8x128xf32>
    %c2 = arith.constant 2 : index
    %c0_4 = arith.constant 0 : index
    %c0_5 = arith.constant 0 : index
    %6 = vector.load %arg1[%c2, %c0_4, %c0_5] : memref<7x8x128xf32, #tpu.memory_space<vmem>>, vector<1x8x128xf32>
    %7 = vector.shape_cast %6 : vector<1x8x128xf32> to vector<8x128xf32>
    %cst_6 = arith.constant 2.000000e+00 : f32
    %8 = vector.broadcast %cst_6 : f32 to vector<8x128xf32>
    %9 = arith.mulf %7, %8 : vector<8x128xf32>
    %c3 = arith.constant 3 : index
    %c0_7 = arith.constant 0 : index
    %c0_8 = arith.constant 0 : index
    %10 = vector.load %arg1[%c3, %c0_7, %c0_8] : memref<7x8x128xf32, #tpu.memory_space<vmem>>, vector<1x8x128xf32>
    %11 = vector.shape_cast %10 : vector<1x8x128xf32> to vector<8x128xf32>
    %12 = math.exp %11 : vector<8x128xf32>
    %cst_9 = arith.constant 1.000000e+01 : f32
    %13 = vector.broadcast %cst_9 : f32 to vector<8x128xf32>
    %14 = arith.minimumf %12, %13 : vector<8x128xf32>
    %c4 = arith.constant 4 : index
    %c0_10 = arith.constant 0 : index
    %c0_11 = arith.constant 0 : index
    %15 = vector.load %arg1[%c4, %c0_10, %c0_11] : memref<7x8x128xf32, #tpu.memory_space<vmem>>, vector<1x8x128xf32>
    %16 = vector.shape_cast %15 : vector<1x8x128xf32> to vector<8x128xf32>
    %17 = math.exp %16 : vector<8x128xf32>
    %cst_12 = arith.constant 1.000000e+01 : f32
    %18 = vector.broadcast %cst_12 : f32 to vector<8x128xf32>
    %19 = arith.minimumf %17, %18 : vector<8x128xf32>
    %c5 = arith.constant 5 : index
    %c0_13 = arith.constant 0 : index
    %c0_14 = arith.constant 0 : index
    %20 = vector.load %arg1[%c5, %c0_13, %c0_14] : memref<7x8x128xf32, #tpu.memory_space<vmem>>, vector<1x8x128xf32>
    %21 = vector.shape_cast %20 : vector<1x8x128xf32> to vector<8x128xf32>
    %22 = math.exp %21 : vector<8x128xf32>
    %cst_15 = arith.constant 1.000000e+01 : f32
    %23 = vector.broadcast %cst_15 : f32 to vector<8x128xf32>
    %24 = arith.minimumf %22, %23 : vector<8x128xf32>
    %c6 = arith.constant 6 : index
    %c0_16 = arith.constant 0 : index
    %c0_17 = arith.constant 0 : index
    %25 = vector.load %arg1[%c6, %c0_16, %c0_17] : memref<7x8x128xf32, #tpu.memory_space<vmem>>, vector<1x8x128xf32>
    %26 = vector.shape_cast %25 : vector<1x8x128xf32> to vector<8x128xf32>
    %c0_18 = arith.constant 0 : index
    %c0_19 = arith.constant 0 : index
    %c0_20 = arith.constant 0 : index
    %27 = vector.load %arg2[%c0_18, %c0_19, %c0_20] : memref<7x8x128xf32, #tpu.memory_space<vmem>>, vector<1x8x128xf32>
    %28 = vector.shape_cast %27 : vector<1x8x128xf32> to vector<8x128xf32>
    %c1_21 = arith.constant 1 : index
    %c0_22 = arith.constant 0 : index
    %c0_23 = arith.constant 0 : index
    %29 = vector.load %arg2[%c1_21, %c0_22, %c0_23] : memref<7x8x128xf32, #tpu.memory_space<vmem>>, vector<1x8x128xf32>
    %30 = vector.shape_cast %29 : vector<1x8x128xf32> to vector<8x128xf32>
    %cst_24 = arith.constant 2.000000e+00 : f32
    %31 = vector.broadcast %cst_24 : f32 to vector<8x128xf32>
    %32 = arith.mulf %30, %31 : vector<8x128xf32>
    %c2_25 = arith.constant 2 : index
    %c0_26 = arith.constant 0 : index
    %c0_27 = arith.constant 0 : index
    %33 = vector.load %arg2[%c2_25, %c0_26, %c0_27] : memref<7x8x128xf32, #tpu.memory_space<vmem>>, vector<1x8x128xf32>
    %34 = vector.shape_cast %33 : vector<1x8x128xf32> to vector<8x128xf32>
    %cst_28 = arith.constant 2.000000e+00 : f32
    %35 = vector.broadcast %cst_28 : f32 to vector<8x128xf32>
    %36 = arith.mulf %34, %35 : vector<8x128xf32>
    %c3_29 = arith.constant 3 : index
    %c0_30 = arith.constant 0 : index
    %c0_31 = arith.constant 0 : index
    %37 = vector.load %arg2[%c3_29, %c0_30, %c0_31] : memref<7x8x128xf32, #tpu.memory_space<vmem>>, vector<1x8x128xf32>
    %38 = vector.shape_cast %37 : vector<1x8x128xf32> to vector<8x128xf32>
    %39 = math.exp %38 : vector<8x128xf32>
    %c4_32 = arith.constant 4 : index
    %c0_33 = arith.constant 0 : index
    %c0_34 = arith.constant 0 : index
    %40 = vector.load %arg2[%c4_32, %c0_33, %c0_34] : memref<7x8x128xf32, #tpu.memory_space<vmem>>, vector<1x8x128xf32>
    %41 = vector.shape_cast %40 : vector<1x8x128xf32> to vector<8x128xf32>
    %42 = math.exp %41 : vector<8x128xf32>
    %c5_35 = arith.constant 5 : index
    %c0_36 = arith.constant 0 : index
    %c0_37 = arith.constant 0 : index
    %43 = vector.load %arg2[%c5_35, %c0_36, %c0_37] : memref<7x8x128xf32, #tpu.memory_space<vmem>>, vector<1x8x128xf32>
    %44 = vector.shape_cast %43 : vector<1x8x128xf32> to vector<8x128xf32>
    %45 = math.exp %44 : vector<8x128xf32>
    %c6_38 = arith.constant 6 : index
    %c0_39 = arith.constant 0 : index
    %c0_40 = arith.constant 0 : index
    %46 = vector.load %arg2[%c6_38, %c0_39, %c0_40] : memref<7x8x128xf32, #tpu.memory_space<vmem>>, vector<1x8x128xf32>
    %47 = vector.shape_cast %46 : vector<1x8x128xf32> to vector<8x128xf32>
    %48 = arith.subf %47, %26 : vector<8x128xf32>
    %49 = math.sin %48 : vector<8x128xf32>
    %50 = math.absf %49 : vector<8x128xf32>
    %51 = arith.mulf %14, %19 : vector<8x128xf32>
    %52 = arith.mulf %51, %24 : vector<8x128xf32>
    %53 = arith.mulf %39, %42 : vector<8x128xf32>
    %54 = arith.mulf %53, %45 : vector<8x128xf32>
    %cst_41 = arith.constant 5.000000e-01 : f32
    %55 = vector.broadcast %cst_41 : f32 to vector<8x128xf32>
    %56 = arith.mulf %14, %55 : vector<8x128xf32>
    %cst_42 = arith.constant 5.000000e-01 : f32
    %57 = vector.broadcast %cst_42 : f32 to vector<8x128xf32>
    %58 = arith.mulf %19, %57 : vector<8x128xf32>
    %cst_43 = arith.constant 5.000000e-01 : f32
    %59 = vector.broadcast %cst_43 : f32 to vector<8x128xf32>
    %60 = arith.mulf %24, %59 : vector<8x128xf32>
    %cst_44 = arith.constant 5.000000e-01 : f32
    %61 = vector.broadcast %cst_44 : f32 to vector<8x128xf32>
    %62 = arith.mulf %39, %61 : vector<8x128xf32>
    %cst_45 = arith.constant 5.000000e-01 : f32
    %63 = vector.broadcast %cst_45 : f32 to vector<8x128xf32>
    %64 = arith.mulf %42, %63 : vector<8x128xf32>
    %cst_46 = arith.constant 5.000000e-01 : f32
    %65 = vector.broadcast %cst_46 : f32 to vector<8x128xf32>
    %66 = arith.mulf %45, %65 : vector<8x128xf32>
    %67 = arith.subf %1, %56 : vector<8x128xf32>
    %68 = arith.addf %1, %56 : vector<8x128xf32>
    %69 = arith.subf %5, %58 : vector<8x128xf32>
    %70 = arith.addf %5, %58 : vector<8x128xf32>
    %71 = arith.subf %9, %60 : vector<8x128xf32>
    %72 = arith.addf %9, %60 : vector<8x128xf32>
    %73 = arith.subf %28, %62 : vector<8x128xf32>
    %74 = arith.addf %28, %62 : vector<8x128xf32>
    %75 = arith.subf %32, %64 : vector<8x128xf32>
    %76 = arith.addf %32, %64 : vector<8x128xf32>
    %77 = arith.subf %36, %66 : vector<8x128xf32>
    %78 = arith.addf %36, %66 : vector<8x128xf32>
    %79 = arith.minimumf %68, %74 : vector<8x128xf32>
    %80 = arith.maximumf %67, %73 : vector<8x128xf32>
    %81 = arith.subf %79, %80 : vector<8x128xf32>
    %cst_47 = arith.constant 0.000000e+00 : f32
    %82 = vector.broadcast %cst_47 : f32 to vector<8x128xf32>
    %83 = arith.maximumf %81, %82 : vector<8x128xf32>
    %84 = arith.minimumf %70, %76 : vector<8x128xf32>
    %85 = arith.maximumf %69, %75 : vector<8x128xf32>
    %86 = arith.subf %84, %85 : vector<8x128xf32>
    %cst_48 = arith.constant 0.000000e+00 : f32
    %87 = vector.broadcast %cst_48 : f32 to vector<8x128xf32>
    %88 = arith.maximumf %86, %87 : vector<8x128xf32>
    %89 = arith.minimumf %72, %78 : vector<8x128xf32>
    %90 = arith.maximumf %71, %77 : vector<8x128xf32>
    %91 = arith.subf %89, %90 : vector<8x128xf32>
    %cst_49 = arith.constant 0.000000e+00 : f32
    %92 = vector.broadcast %cst_49 : f32 to vector<8x128xf32>
    %93 = arith.maximumf %91, %92 : vector<8x128xf32>
    %94 = arith.mulf %83, %88 : vector<8x128xf32>
    %95 = arith.mulf %94, %93 : vector<8x128xf32>
    %cst_50 = arith.constant 1.000000e+00 : f32
    %96 = vector.broadcast %cst_50 : f32 to vector<8x128xf32>
    %97 = arith.subf %96, %50 : vector<8x128xf32>
    %98 = arith.mulf %95, %97 : vector<8x128xf32>
    %99 = arith.maximumf %68, %74 : vector<8x128xf32>
    %100 = arith.minimumf %67, %73 : vector<8x128xf32>
    %101 = arith.subf %99, %100 : vector<8x128xf32>
    %cst_51 = arith.constant 0.000000e+00 : f32
    %102 = vector.broadcast %cst_51 : f32 to vector<8x128xf32>
    %103 = arith.maximumf %101, %102 : vector<8x128xf32>
    %104 = arith.maximumf %70, %76 : vector<8x128xf32>
    %105 = arith.minimumf %69, %75 : vector<8x128xf32>
    %106 = arith.subf %104, %105 : vector<8x128xf32>
    %cst_52 = arith.constant 0.000000e+00 : f32
    %107 = vector.broadcast %cst_52 : f32 to vector<8x128xf32>
    %108 = arith.maximumf %106, %107 : vector<8x128xf32>
    %109 = arith.maximumf %72, %78 : vector<8x128xf32>
    %110 = arith.minimumf %71, %77 : vector<8x128xf32>
    %111 = arith.subf %109, %110 : vector<8x128xf32>
    %cst_53 = arith.constant 0.000000e+00 : f32
    %112 = vector.broadcast %cst_53 : f32 to vector<8x128xf32>
    %113 = arith.maximumf %111, %112 : vector<8x128xf32>
    %cst_54 = arith.constant 1.000000e+00 : f32
    %114 = vector.broadcast %cst_54 : f32 to vector<8x128xf32>
    %115 = arith.addf %114, %50 : vector<8x128xf32>
    %116 = arith.subf %28, %1 : vector<8x128xf32>
    %117 = arith.mulf %116, %116 : vector<8x128xf32>
    %118 = arith.subf %32, %5 : vector<8x128xf32>
    %119 = arith.mulf %118, %118 : vector<8x128xf32>
    %120 = arith.addf %117, %119 : vector<8x128xf32>
    %121 = arith.subf %36, %9 : vector<8x128xf32>
    %122 = arith.mulf %121, %121 : vector<8x128xf32>
    %123 = arith.addf %120, %122 : vector<8x128xf32>
    %124 = arith.mulf %49, %49 : vector<8x128xf32>
    %125 = arith.addf %123, %124 : vector<8x128xf32>
    %126 = arith.mulf %103, %103 : vector<8x128xf32>
    %127 = arith.mulf %108, %108 : vector<8x128xf32>
    %128 = arith.addf %126, %127 : vector<8x128xf32>
    %129 = arith.mulf %113, %113 : vector<8x128xf32>
    %130 = arith.addf %128, %129 : vector<8x128xf32>
    %131 = arith.mulf %115, %115 : vector<8x128xf32>
    %132 = arith.addf %130, %131 : vector<8x128xf32>
    %cst_55 = arith.constant 1.000000e-07 : f32
    %133 = vector.broadcast %cst_55 : f32 to vector<8x128xf32>
    %134 = arith.addf %132, %133 : vector<8x128xf32>
    %135 = arith.addf %52, %54 : vector<8x128xf32>
    %136 = arith.subf %135, %98 : vector<8x128xf32>
    %137 = arith.mulf %98, %134 : vector<8x128xf32>
    %138 = arith.mulf %125, %136 : vector<8x128xf32>
    %139 = arith.subf %137, %138 : vector<8x128xf32>
    %140 = arith.mulf %136, %134 : vector<8x128xf32>
    %141 = arith.divf %139, %140 : vector<8x128xf32>
    %cst_56 = arith.constant -1.000000e+00 : f32
    %cst_57 = arith.constant 1.000000e+00 : f32
    %142 = vector.broadcast %cst_56 : f32 to vector<8x128xf32>
    %143 = arith.maximumf %142, %141 : vector<8x128xf32>
    %144 = vector.broadcast %cst_57 : f32 to vector<8x128xf32>
    %145 = arith.minimumf %144, %143 : vector<8x128xf32>
    %cst_58 = arith.constant 1.000000e+00 : f32
    %146 = vector.broadcast %cst_58 : f32 to vector<8x128xf32>
    %147 = arith.subf %146, %145 : vector<8x128xf32>
    %c0_59 = arith.constant 0 : index
    %c0_60 = arith.constant 0 : index
    %148 = vector.load %arg3[%c0_59, %c0_60] : memref<8x128xf32, #tpu.memory_space<vmem>>, vector<8x128xf32>
    tpu.vector_store %arg3[%c0_59, %c0_60], %147 {strides = array<i32>} : memref<8x128xf32, #tpu.memory_space<vmem>>, vector<8x128xf32>,
    return
  }
  func.func @transform_0(%arg0: i32) -> (i32, i32, i32) {
    %c0_i32 = arith.constant 0 : i32
    %c0_i32_0 = arith.constant 0 : i32
    %c0_i32_1 = arith.constant 0 : i32
    return %c0_i32, %arg0, %c0_i32_0 : i32, i32, i32
  }
  func.func @transform_1(%arg0: i32) -> (i32, i32, i32) {
    %c0_i32 = arith.constant 0 : i32
    %c0_i32_0 = arith.constant 0 : i32
    %c0_i32_1 = arith.constant 0 : i32
    return %c0_i32, %arg0, %c0_i32_0 : i32, i32, i32
  }
  func.func @transform_2(%arg0: i32) -> (i32, i32) {
    %c0_i32 = arith.constant 0 : i32
    %c0_i32_0 = arith.constant 0 : i32
    return %arg0, %c0_i32 : i32, i32
  }
}

</mosaic_0001>

<llo_original>
// kernel: rd_iou_loss_elementwise.1
$region0: #{rd_iou_loss_elementwise.1}
  #allocation0 [shape = 'u32[]', space=smem, size = 0x4, offset = 0x4, fixed_abs, tag = 'smem constant byte address 0x4 - core index']
  #allocation1 [shape = 'u32[72,128]{1,0:T(1,128)}', space=vmem, size = 0x9000, scoped, tag = 'internal scratch']
  %s0 = inlined_call_operand.vmem [shape: f32[7,8,128], index: 0, kind: input, shape index: {}]
  %s1 = inlined_call_operand.vmem [shape: f32[7,8,128], index: 1, kind: input, shape index: {}]
  %s2 = inlined_call_operand.vmem [shape: f32[8,128], index: 2, kind: output, shape index: {}]
  %s3 = sld [smem:[#allocation0]]
  $region18: #{rd_iou_loss_elementwise.1} parent=0
    _
  %s5 = ssub.s32 1, %s3
  %s6 = scalar_select 0, %s5, %s3
  // Predicated region
  $region2: #{rd_iou_loss_elementwise.1} parent=0 // pred_check
    _
  $region3: #{rd_iou_loss_elementwise.1} parent=0 // pred_check_branch
    %8 = sbr.rel (0) target = $region5
  $region4: #{rd_iou_loss_elementwise.1} parent=0 // pred_region
    _
  $region5: #{rd_iou_loss_elementwise.1} parent=0 // pred_fallthru
    _
  // Predicated region
  $region6: #{rd_iou_loss_elementwise.1} parent=0 // pred_check
    _
  $region7: #{rd_iou_loss_elementwise.1} parent=0 // pred_check_branch
    %10 = sbr.rel (0) target = $region9
  $region8: #{rd_iou_loss_elementwise.1} parent=0 // pred_region
    _
  $region9: #{rd_iou_loss_elementwise.1} parent=0 // pred_fallthru
    _
  %v11 = vld [vmem:[%s0] sm:$0xff]
  %s12 = scalar_lea.vmem %s0, 8
  %v13 = vld [vmem:[%s12] sm:$0xff]
  %v14 = vmul.f32 %v13, 2.0
  %s15 = scalar_lea.vmem %s0, 16
  %v16 = vld [vmem:[%s15] sm:$0xff]
  %v17 = vmul.f32 %v16, 2.0
  %s18 = scalar_lea.vmem %s0, 24
  %v19 = vld [vmem:[%s18] sm:$0xff]
  %v20 = vmul.f32 %v19, 1.442695
  %v21 = vpow.pop %v20
  %v22 = vmin.f32 %v21, 10.0
  %s23 = scalar_lea.vmem %s0, 32
  %v24 = vld [vmem:[%s23] sm:$0xff]
  %v25 = vmul.f32 %v24, 1.442695
  %v26 = vpow.pop %v25
  %v27 = vmin.f32 %v26, 10.0
  %s28 = scalar_lea.vmem %s0, 40
  %v29 = vld [vmem:[%s28] sm:$0xff]
  %v30 = vmul.f32 %v29, 1.442695
  %v31 = vpow.pop %v30
  %v32 = vmin.f32 %v31, 10.0
  %s33 = scalar_lea.vmem %s0, 48
  %v34 = vld [vmem:[%s33] sm:$0xff]
  %v35 = vld [vmem:[%s1] sm:$0xff]
  %s36 = scalar_lea.vmem %s1, 8
  %v37 = vld [vmem:[%s36] sm:$0xff]
  %v38 = vmul.f32 %v37, 2.0
  %s39 = scalar_lea.vmem %s1, 16
  %v40 = vld [vmem:[%s39] sm:$0xff]
  %v41 = vmul.f32 %v40, 2.0
  %s42 = scalar_lea.vmem %s1, 24
  %v43 = vld [vmem:[%s42] sm:$0xff]
  %v44 = vmul.f32 %v43, 1.442695
  %v45 = vpow.pop %v44
  %s46 = scalar_lea.vmem %s1, 32
  %v47 = vld [vmem:[%s46] sm:$0xff]
  %v48 = vmul.f32 %v47, 1.442695
  %v49 = vpow.pop %v48
  %s50 = scalar_lea.vmem %s1, 40
  %v51 = vld [vmem:[%s50] sm:$0xff]
  %v52 = vmul.f32 %v51, 1.442695
  %v53 = vpow.pop %v52
  %s54 = scalar_lea.vmem %s1, 48
  %v55 = vld [vmem:[%s54] sm:$0xff]
  %v56 = vsub.f32 %v55, %v34
  %v57 = vand.u32 2147483647, %v56
  %vm58 = vcmp.le.f32.partialorder %v57, 0.7853982
  %vm59 = vcmp.lt.s32.totalorder %v56, 0
  %v60 = vand.u32 %v56, 2139095040
  %v61 = vshrl.u32 %v60, 23
  %v62 = vsub.s32 %v61, 127
  %v63 = vand.u32 2147483647, %v56
  %v64 = vand.u32 %v63, 8388607
  %v65 = vor.u32 %v64, 8388608
  %v66 = vsub.s32 0, %v65
  %v67 = vadd.s32 %v62, 1
  %vm68 = vcmp.gt.s32.totalorder %v67, 0
  %v69 = vsel %vm68, %v67, 0
  %v70 = vshrl.u32 %v69, 5
  %v71 = vand.u32 %v69, 31
  %v72 = vsub.s32 32, %v71
  %v73 = vshrl.u32 683565275, %v72
  %v74 = vshll.u32 683565275, %v71
  %v75 = vshrl.u32 2475754826, %v72
  %v76 = vor.u32 %v74, %v75
  %v77 = vshll.u32 2475754826, %v71
  %v78 = vshrl.u32 2131351028, %v72
  %v79 = vor.u32 %v77, %v78
  %v80 = vshll.u32 2131351028, %v71
  %v81 = vshrl.u32 2102212464, %v72
  %v82 = vor.u32 %v80, %v81
  %v83 = vshll.u32 2102212464, %v71
  %v84 = vshrl.u32 920167782, %v72
  %v85 = vor.u32 %v83, %v84
  %v86 = vshll.u32 920167782, %v71
  %v87 = vshrl.u32 1326507024, %v72
  %v88 = vor.u32 %v86, %v87
  %vm89 = vcmp.lt.s32.totalorder %v70, 1
  %vm90 = vcmp.lt.s32.totalorder %v70, 2
  %vm91 = vcmp.lt.s32.totalorder %v70, 3
  %vm92 = vcmp.lt.s32.totalorder %v70, 4
  %v93 = vsel %vm89, %v73, %v76
  %v94 = vsel %vm92, %v82, 2102212464
  %v95 = vsel %vm91, %v79, %v94
  %v96 = vsel %vm90, %v93, %v95
  %v97 = vsel %vm89, %v76, %v79
  %v98 = vsel %vm92, %v85, 920167782
  %v99 = vsel %vm91, %v82, %v98
  %v100 = vsel %vm90, %v97, %v99
  %v101 = vsel %vm89, %v79, %v82
  %v102 = vsel %vm92, %v88, 1326507024
  %v103 = vsel %vm91, %v85, %v102
  %v104 = vsel %vm90, %v101, %v103
  %v105 = vshll.u32 %v65, 8
  %v106 = vand.u32 %v105, 65535
  %v107 = vshrl.u32 %v105, 16
  %v108 = vand.u32 %v104, 65535
  %v109 = vshrl.u32 %v104, 16
  %v110 = vmul.u32 %v106, %v108
  %v111 = vmul.u32 %v106, %v109
  %v112 = vmul.u32 %v107, %v108
  %v113 = vmul.u32 %v107, %v109
  %v114 = vshll.u32 %v111, 16
  %v115 = vshrl.u32 %v111, 16
  %v116 = vshll.u32 %v112, 16
  %v117 = vshrl.u32 %v112, 16
  %vm118 = vc.u32 %v110, %v114
  %v119 = vsel %vm118, 1, 0
  %v120 = vadd.s32 %v110, %v114
  %v121 = vadd.s32 %v113, %v119
  %vm122 = vc.u32 %v120, %v116
  %v123 = vsel %vm122, 1, 0
  %v124 = vadd.s32 %v120, %v116
  %v125 = vadd.s32 %v121, %v123
  %v126 = vadd.s32 %v125, %v115
  %v127 = vadd.s32 %v126, %v117
  %v128 = vand.u32 %v105, 65535
  %v129 = vshrl.u32 %v105, 16
  %v130 = vand.u32 %v100, 65535
  %v131 = vshrl.u32 %v100, 16
  %v132 = vmul.u32 %v128, %v130
  %v133 = vmul.u32 %v128, %v131
  %v134 = vmul.u32 %v129, %v130
  %v135 = vmul.u32 %v129, %v131
  %v136 = vshll.u32 %v133, 16
  %v137 = vshrl.u32 %v133, 16
  %v138 = vshll.u32 %v134, 16
  %v139 = vshrl.u32 %v134, 16
  %vm140 = vc.u32 %v132, %v136
  %v141 = vsel %vm140, 1, 0
  %v142 = vadd.s32 %v132, %v136
  %v143 = vadd.s32 %v135, %v141
  %vm144 = vc.u32 %v142, %v138
  %v145 = vsel %vm144, 1, 0
  %v146 = vadd.s32 %v142, %v138
  %v147 = vadd.s32 %v143, %v145
  %v148 = vadd.s32 %v147, %v137
  %v149 = vadd.s32 %v148, %v139
  %v150 = vmul.u32 %v105, %v96
  %v151 = vadd.s32 %v127, %v146
  %vm152 = vc.u32 %v127, %v146
  %v153 = vadd.s32 %v149, 1
  %v154 = vsel %vm152, %v153, %v149
  %v155 = vadd.s32 %v150, %v154
  %v156 = vadd.s32 %v155, 536870912
  %v157 = vshrl.u32 %v156, 30
  %v158 = vshll.u32 %v157, 30
  %v159 = vsub.s32 %v155, %v158
  %vm160 = vcmp.lt.s32.totalorder %v159, 0
  %v161 = vsub.s32 0, %v159
  %v162 = vsel %vm160, %v161, %v159
  %v163 = vclz %v162
  %v164 = vsub.s32 %v163, 2
  %vm165 = vcmp.gt.s32.totalorder 0, %v164
  %v166 = vsel %vm165, 0, %v164
  %v167 = vsub.s32 32, %v166
  %v168 = vshll.u32 %v159, %v166
  %v169 = vshrl.u32 %v151, %v167
  %v170 = vor.u32 %v168, %v169
  %v171 = vsub.s32 4294967266, %v166
  %v172 = vadd.s32 %v171, 127
  %v173 = vshll.u32 %v172, 23
  %v174 = vor.u32 4788187, %v173
  %v175 = vand.u32 2147483647, %v174
  %v177 = vcvt.s32.f32 %v170
  %v178 = vmul.f32 %v177, %v175
  %v179 = vxor.u32 %v178, 2147483648
  %v180 = vsel %vm59, %v179, %v178
  %v181 = vsub.s32 4, %v157
  %v182 = vsel %vm59, %v181, %v157
  %v183 = vsel %vm58, %v56, %v180
  %v184 = vsel %vm58, 0, %v182
  %v185 = vmul.f32 %v183, %v183
  %v186 = vmul.f32 %v185, -0.001358992
  %v187 = vadd.f32 %v186, 0.041655596
  %v188 = vmul.f32 %v185, %v187
  %v189 = vadd.f32 %v188, -0.4999988
  %v190 = vmul.f32 %v185, %v189
  %v191 = vadd.f32 1.0, %v190
  %v192 = vmul.f32 %v183, %v183
  %v193 = vmul.f32 %v192, -0.00019511016
  %v194 = vadd.f32 %v193, 0.008332121
  %v195 = vmul.f32 %v192, %v194
  %v196 = vadd.f32 %v195, -0.16666654
  %v197 = vmul.f32 %v192, %v196
  %v198 = vadd.f32 %v197, 1.0
  %v199 = vmul.f32 %v198, %v183
  %vm200 = vweird.f32 %v56
  %v201 = vadd.s32 %v184, 3
  %v202 = vand.u32 %v201, 3
  %vm203 = vcmp.lt.s32.totalorder %v202, 2
  %vm204 = vcmp.eq.s32.totalorder %v202, 0
  %v205 = vxor.u32 %v199, 2147483648
  %v206 = vsel %vm204, %v191, %v205
  %vm207 = vcmp.eq.s32.totalorder %v202, 2
  %v208 = vxor.u32 %v191, 2147483648
  %v209 = vsel %vm207, %v208, %v199
  %v210 = vsel %vm203, %v206, %v209
  %v211 = vsel %vm200, nan, %v210
  %v212 = vand.u32 2147483647, %v211
  %v213 = vmul.f32 %v22, %v27
  %v214 = vmul.f32 %v213, %v32
  %v215 = vmul.f32 %v45, %v49
  %v216 = vmul.f32 %v215, %v53
  %v217 = vmul.f32 %v22, 0.5
  %v218 = vmul.f32 %v27, 0.5
  %v219 = vmul.f32 %v32, 0.5
  %v220 = vmul.f32 %v45, 0.5
  %v221 = vmul.f32 %v49, 0.5
  %v222 = vmul.f32 %v53, 0.5
  %v223 = vsub.f32 %v11, %v217
  %v224 = vadd.f32 %v11, %v217
  %v225 = vsub.f32 %v14, %v218
  %v226 = vadd.f32 %v14, %v218
  %v227 = vsub.f32 %v17, %v219
  %v228 = vadd.f32 %v17, %v219
  %v229 = vsub.f32 %v35, %v220
  %v230 = vadd.f32 %v35, %v220
  %v231 = vsub.f32 %v38, %v221
  %v232 = vadd.f32 %v38, %v221
  %v233 = vsub.f32 %v41, %v222
  %v234 = vadd.f32 %v41, %v222
  %v235 = vmin.f32 %v224, %v230
  %v236 = vmax.f32 %v223, %v229
  %v237 = vsub.f32 %v235, %v236
  %v238 = vmax.f32 %v237, 0.0
  %v239 = vmin.f32 %v226, %v232
  %v240 = vmax.f32 %v225, %v231
  %v241 = vsub.f32 %v239, %v240
  %v242 = vmax.f32 %v241, 0.0
  %v243 = vmin.f32 %v228, %v234
  %v244 = vmax.f32 %v227, %v233
  %v245 = vsub.f32 %v243, %v244
  %v246 = vmax.f32 %v245, 0.0
  %v247 = vmul.f32 %v238, %v242
  %v248 = vmul.f32 %v247, %v246
  %v249 = vsub.f32 1.0, %v212
  %v250 = vmul.f32 %v248, %v249
  %v251 = vmax.f32 %v224, %v230
  %v252 = vmin.f32 %v223, %v229
  %v253 = vsub.f32 %v251, %v252
  %v254 = vmax.f32 %v253, 0.0
  %v255 = vmax.f32 %v226, %v232
  %v256 = vmin.f32 %v225, %v231
  %v257 = vsub.f32 %v255, %v256
  %v258 = vmax.f32 %v257, 0.0
  %v259 = vmax.f32 %v228, %v234
  %v260 = vmin.f32 %v227, %v233
  %v261 = vsub.f32 %v259, %v260
  %v262 = vmax.f32 %v261, 0.0
  %v263 = vadd.f32 %v212, 1.0
  %v264 = vsub.f32 %v35, %v11
  %v265 = vmul.f32 %v264, %v264
  %v266 = vsub.f32 %v38, %v14
  %v267 = vmul.f32 %v266, %v266
  %v268 = vadd.f32 %v265, %v267
  %v269 = vsub.f32 %v41, %v17
  %v270 = vmul.f32 %v269, %v269
  %v271 = vadd.f32 %v268, %v270
  %v272 = vmul.f32 %v211, %v211
  %v273 = vadd.f32 %v271, %v272
  %v274 = vmul.f32 %v254, %v254
  %v275 = vmul.f32 %v258, %v258
  %v276 = vadd.f32 %v274, %v275
  %v277 = vmul.f32 %v262, %v262
  %v278 = vadd.f32 %v276, %v277
  %v279 = vmul.f32 %v263, %v263
  %v280 = vadd.f32 %v278, %v279
  %v281 = vadd.f32 %v280, 1e-07
  %v282 = vadd.f32 %v214, %v216
  %v283 = vsub.f32 %v282, %v250
  %v284 = vmul.f32 %v250, %v281
  %v285 = vmul.f32 %v273, %v283
  %v286 = vsub.f32 %v284, %v285
  %v287 = vmul.f32 %v283, %v281
  %v288 = vrcp.pop %v287
  %v289 = vmul.f32 %v287, %v288
  %v290 = vsub.f32 1.0, %v289
  %v291 = vmul.f32 %v288, %v290
  %v292 = vadd.f32 %v288, %v291
  %vm293 = vweird.f32 %v287
  %vm294 = vweird.f32 %v288
  %vm295 = vmor %vm293, %vm294
  %v296 = vsel %vm295, %v288, %v292
  %v297 = vand.u32 2147483647, %v287
  %vm298 = vcmp.eq.f32.partialorder %v297, 8.507059e+37
  %v299 = vand.u32 %v287, 2147483648
  %v300 = vor.u32 1.1754944e-38, %v299
  %v301 = vsel %vm298, %v300, %v296
  %v302 = vmul.f32 %v286, %v301
  %v303 = vmax.f32 %v302, -1.0
  %v304 = vmin.f32 %v303, 1.0
  %v305 = vsub.f32 1.0, %v304
  %306 = vst [vmem:[%s2] sm:$0xff] %v305
  // Predicated region
  $region10: #{rd_iou_loss_elementwise.1} parent=0 // pred_check
    _
  $region11: #{rd_iou_loss_elementwise.1} parent=0 // pred_check_branch
    %308 = sbr.rel (0) target = $region13
  $region12: #{rd_iou_loss_elementwise.1} parent=0 // pred_region
    _
  $region13: #{rd_iou_loss_elementwise.1} parent=0 // pred_fallthru
    _
  // Predicated region
  $region14: #{rd_iou_loss_elementwise.1} parent=0 // pred_check
    _
  $region15: #{rd_iou_loss_elementwise.1} parent=0 // pred_check_branch
    %310 = sbr.rel (0) target = $region17
  $region16: #{rd_iou_loss_elementwise.1} parent=0 // pred_region
    _
  $region17: #{rd_iou_loss_elementwise.1} parent=0 // pred_fallthru
    _

</llo_original>
